<compile_context>
chip_gen: v7x
topology: tpu7x:2x2x1
jax: 0.10.0
libtpu: 0.0.40
codegen_flags: <defaults>
</compile_context>

<pallas_src>
import functools

import jax
import jax.numpy as jnp
from jax.experimental import pallas as pl
from jax.experimental.pallas import tpu as pltpu


def _arc_kernel(x_ref, w_ref, out_ref, *, num_hops, h_feats):
    # x_ref  : (num_hops+1, tile_n, F)  -- all hops for this row tile
    # w_ref  : (F, H)                   -- shared Linear weight (x @ W)
    # out_ref: (tile_n, num_hops*H)     -- hstacked residuals (lane-dense)
    w = w_ref[...]
    x0 = x_ref[0]                                     # (tile_n, F)
    # Static unrolled loop over hops (num_hops is small, e.g. 4).
    for k in range(num_hops):
        diff = x_ref[k + 1] - x0                      # (tile_n, F)
        res = jnp.dot(diff, w, preferred_element_type=jnp.float32)
        out_ref[:, k * h_feats:(k + 1) * h_feats] = res.astype(out_ref.dtype)


def _round_up(x, m):
    return ((x + m - 1) // m) * m


def arc_forward(x_stack, weight, bias, *, tile_n_cap=4096):
    """x_stack: (num_hops+1, N, in_feats); weight: (in_feats, h_feats); bias: (h_feats,)

    Returns residual_embed: (N, num_hops * h_feats), matching torch.hstack order.
    Note: the bias cancels exactly in (h_{k+1} - h_0), so it is not needed in
    the kernel (differences vs add-then-subtract are at the ULP level).
    """
    del bias  # cancels algebraically in the residuals
    num_hops_p1, n, in_feats = x_stack.shape
    num_hops = num_hops_p1 - 1
    h_feats = weight.shape[1]
    out_cols = num_hops * h_feats

    # Row tile: multiple of 8 (f32 sublane), capped for VMEM headroom (v7x 64MiB).
    tile_n = min(tile_n_cap, _round_up(n, 8))
    grid = (pl.cdiv(n, tile_n),)

    kernel = functools.partial(_arc_kernel, num_hops=num_hops, h_feats=h_feats)

    out = pl.pallas_call(
        kernel,
        out_shape=jax.ShapeDtypeStruct((n, out_cols), jnp.float32),
        grid=grid,
        in_specs=[
            # All hops for this row tile, straight from the stacked input
            # (no wrapper slicing => no extra HBM passes).
            pl.BlockSpec((num_hops_p1, tile_n, in_feats), lambda i: (0, i, 0)),
            # Shared weight, resident across the grid.
            pl.BlockSpec((in_feats, h_feats), lambda i: (0, 0)),
        ],
        # Lane-dense hstacked output written directly (no wrapper transpose).
        out_specs=pl.BlockSpec((tile_n, out_cols), lambda i: (i, 0)),
        compiler_params=pltpu.CompilerParams(
            dimension_semantics=("parallel",)),
    )(x_stack, weight)

    return out


def arc_forward_ref(x_stack, weight, bias):
    """Pure-JAX reference of the PyTorch forward."""
    h = jnp.einsum('knf,fh->knh', x_stack, weight) + bias[None, None, :]
    res = h[1:] - h[0:1]
    return res.transpose(1, 0, 2).reshape(x_stack.shape[1], -1)


if __name__ == "__main__":
    # Small shapes consistent with the module defaults.
    in_feats = 16
    h_feats = 32
    num_hops = 4

    key = jax.random.PRNGKey(0)
    kx, kw, kb, kx2 = jax.random.split(key, 4)

    # Deterministic Linear(in_feats, h_feats) params (kaiming-uniform-ish scale).
    bound = 1.0 / jnp.sqrt(jnp.float32(in_feats))
    weight = jax.random.uniform(kw, (in_feats, h_feats), jnp.float32, -bound, bound)
    bias = jax.random.uniform(kb, (h_feats,), jnp.float32, -bound, bound)

    # Case 1: tiny N (full block).
    n_nodes = 8
    x_stack = jax.random.normal(kx, (num_hops + 1, n_nodes, in_feats), jnp.float32)
    out = jax.block_until_ready(arc_forward(x_stack, weight, bias))
    ref = arc_forward_ref(x_stack, weight, bias)
    assert out.shape == (n_nodes, num_hops * h_feats)
    assert jnp.allclose(out, ref, atol=1e-5, rtol=1e-5), "mismatch vs reference (case 1)"

    # Case 2: N not a multiple of the row tile -> exercises grid tiling + overhang.
    n_nodes2 = 200
    x_stack2 = jax.random.normal(kx2, (num_hops + 1, n_nodes2, in_feats), jnp.float32)
    out2 = jax.block_until_ready(arc_forward(x_stack2, weight, bias, tile_n_cap=64))
    ref2 = arc_forward_ref(x_stack2, weight, bias)
    assert out2.shape == (n_nodes2, num_hops * h_feats)
    assert jnp.allclose(out2, ref2, atol=1e-5, rtol=1e-5), "mismatch vs reference (case 2)"

    # NOTE: CrossAttn / get_train_loss / get_test_score are not part of
    # ARC.forward and are therefore not exercised here.
    # TODO(synk): dropout / extra hidden layers (num_layers > 2) are not fused;
    # the default config (num_layers=2, dropout=0) uses exactly one Linear.
    print("KERNEL_OK")
</pallas_src>

<mosaic_0001>
module attributes {stable_mosaic.version = 11 : i64} {
  func.func @_arc_kernel(%arg0: i32, %arg1: memref<5x8x16xf32, #tpu.memory_space<vmem>>, %arg2: memref<16x32xf32, #tpu.memory_space<vmem>>, %arg3: memref<8x128xf32, #tpu.memory_space<vmem>>) attributes {dimension_semantics = [#tpu.dimension_semantics<parallel>], iteration_bounds = array<i64: 1>, scalar_prefetch = 0 : i64, scratch_operands = 0 : i64, tpu.core_type = #tpu.core_type<tc>, window_params = [{transform_indices = @transform_0, window_bounds = array<i64: 5, 8, 16>}, {pipeline_mode = #tpu.pipeline_mode<synchronous>, transform_indices = @transform_1, window_bounds = array<i64: 16, 32>}, {transform_indices = @transform_2, window_bounds = array<i64: 8, 128>}]} {
    %c0 = arith.constant 0 : index
    %c0_0 = arith.constant 0 : index
    %0 = vector.load %arg2[%c0, %c0_0] : memref<16x32xf32, #tpu.memory_space<vmem>>, vector<16x32xf32>
    %c0_1 = arith.constant 0 : index
    %c0_2 = arith.constant 0 : index
    %c0_3 = arith.constant 0 : index
    %1 = vector.load %arg1[%c0_1, %c0_2, %c0_3] : memref<5x8x16xf32, #tpu.memory_space<vmem>>, vector<1x8x16xf32>
    %2 = vector.shape_cast %1 : vector<1x8x16xf32> to vector<8x16xf32>
    %c1 = arith.constant 1 : index
    %c0_4 = arith.constant 0 : index
    %c0_5 = arith.constant 0 : index
    %3 = vector.load %arg1[%c1, %c0_4, %c0_5] : memref<5x8x16xf32, #tpu.memory_space<vmem>>, vector<1x8x16xf32>
    %4 = vector.shape_cast %3 : vector<1x8x16xf32> to vector<8x16xf32>
    %5 = arith.subf %4, %2 : vector<8x16xf32>
    %cst = arith.constant dense<0.000000e+00> : vector<8x32xf32>
    %6 = tpu.matmul %5, %0, %cst {dimension_numbers = #tpu.dot_dimension_numbers<[1], [0], [0], [1], [0, 0, 1, 1], [], []>} : vector<8x16xf32>, vector<16x32xf32>, vector<8x32xf32> -> vector<8x32xf32>
    %c0_6 = arith.constant 0 : index
    %c0_7 = arith.constant 0 : index
    %7 = vector.load %arg3[%c0_6, %c0_7] : memref<8x128xf32, #tpu.memory_space<vmem>>, vector<8x32xf32>
    tpu.vector_store %arg3[%c0_6, %c0_7], %6 {strides = array<i32>} : memref<8x128xf32, #tpu.memory_space<vmem>>, vector<8x32xf32>,
    %c2 = arith.constant 2 : index
    %c0_8 = arith.constant 0 : index
    %c0_9 = arith.constant 0 : index
    %8 = vector.load %arg1[%c2, %c0_8, %c0_9] : memref<5x8x16xf32, #tpu.memory_space<vmem>>, vector<1x8x16xf32>
    %9 = vector.shape_cast %8 : vector<1x8x16xf32> to vector<8x16xf32>
    %10 = arith.subf %9, %2 : vector<8x16xf32>
    %cst_10 = arith.constant dense<0.000000e+00> : vector<8x32xf32>
    %11 = tpu.matmul %10, %0, %cst_10 {dimension_numbers = #tpu.dot_dimension_numbers<[1], [0], [0], [1], [0, 0, 1, 1], [], []>} : vector<8x16xf32>, vector<16x32xf32>, vector<8x32xf32> -> vector<8x32xf32>
    %c0_11 = arith.constant 0 : index
    %c32 = arith.constant 32 : index
    %12 = vector.load %arg3[%c0_11, %c32] : memref<8x128xf32, #tpu.memory_space<vmem>>, vector<8x32xf32>
    tpu.vector_store %arg3[%c0_11, %c32], %11 {strides = array<i32>} : memref<8x128xf32, #tpu.memory_space<vmem>>, vector<8x32xf32>,
    %c3 = arith.constant 3 : index
    %c0_12 = arith.constant 0 : index
    %c0_13 = arith.constant 0 : index
    %13 = vector.load %arg1[%c3, %c0_12, %c0_13] : memref<5x8x16xf32, #tpu.memory_space<vmem>>, vector<1x8x16xf32>
    %14 = vector.shape_cast %13 : vector<1x8x16xf32> to vector<8x16xf32>
    %15 = arith.subf %14, %2 : vector<8x16xf32>
    %cst_14 = arith.constant dense<0.000000e+00> : vector<8x32xf32>
    %16 = tpu.matmul %15, %0, %cst_14 {dimension_numbers = #tpu.dot_dimension_numbers<[1], [0], [0], [1], [0, 0, 1, 1], [], []>} : vector<8x16xf32>, vector<16x32xf32>, vector<8x32xf32> -> vector<8x32xf32>
    %c0_15 = arith.constant 0 : index
    %c64 = arith.constant 64 : index
    %17 = vector.load %arg3[%c0_15, %c64] : memref<8x128xf32, #tpu.memory_space<vmem>>, vector<8x32xf32>
    tpu.vector_store %arg3[%c0_15, %c64], %16 {strides = array<i32>} : memref<8x128xf32, #tpu.memory_space<vmem>>, vector<8x32xf32>,
    %c4 = arith.constant 4 : index
    %c0_16 = arith.constant 0 : index
    %c0_17 = arith.constant 0 : index
    %18 = vector.load %arg1[%c4, %c0_16, %c0_17] : memref<5x8x16xf32, #tpu.memory_space<vmem>>, vector<1x8x16xf32>
    %19 = vector.shape_cast %18 : vector<1x8x16xf32> to vector<8x16xf32>
    %20 = arith.subf %19, %2 : vector<8x16xf32>
    %cst_18 = arith.constant dense<0.000000e+00> : vector<8x32xf32>
    %21 = tpu.matmul %20, %0, %cst_18 {dimension_numbers = #tpu.dot_dimension_numbers<[1], [0], [0], [1], [0, 0, 1, 1], [], []>} : vector<8x16xf32>, vector<16x32xf32>, vector<8x32xf32> -> vector<8x32xf32>
    %c0_19 = arith.constant 0 : index
    %c96 = arith.constant 96 : index
    %22 = vector.load %arg3[%c0_19, %c96] : memref<8x128xf32, #tpu.memory_space<vmem>>, vector<8x32xf32>
    tpu.vector_store %arg3[%c0_19, %c96], %21 {strides = array<i32>} : memref<8x128xf32, #tpu.memory_space<vmem>>, vector<8x32xf32>,
    return
  }
  func.func @transform_0(%arg0: i32) -> (i32, i32, i32) {
    %c0_i32 = arith.constant 0 : i32
    %c0_i32_0 = arith.constant 0 : i32
    %c0_i32_1 = arith.constant 0 : i32
    return %c0_i32, %arg0, %c0_i32_0 : i32, i32, i32
  }
  func.func @transform_1(%arg0: i32) -> (i32, i32) {
    %c0_i32 = arith.constant 0 : i32
    %c0_i32_0 = arith.constant 0 : i32
    %c0_i32_1 = arith.constant 0 : i32
    return %c0_i32, %c0_i32_0 : i32, i32
  }
  func.func @transform_2(%arg0: i32) -> (i32, i32) {
    %c0_i32 = arith.constant 0 : i32
    %c0_i32_0 = arith.constant 0 : i32
    return %arg0, %c0_i32 : i32, i32
  }
}

</mosaic_0001>

<llo_original>
// kernel: tpu_custom_call.1
$region0: #{tpu_custom_call.1}
  #allocation0 [shape = 'u32[]', space=smem, size = 0x4, offset = 0x4, fixed_abs, tag = 'smem constant byte address 0x4 - core index']
  #allocation1 [shape = 'u32[144,128]{1,0:T(1,128)}', space=vmem, size = 0x12000, scoped, tag = 'internal scratch']
  %s0 = inlined_call_operand.hbm [shape: f32[5,8,16], index: 0, kind: input, shape index: {}]
  %s1 = inlined_call_operand.hbm [shape: f32[16,32], index: 1, kind: input, shape index: {}]
  %s2 = inlined_call_operand.hbm [shape: f32[8,128], index: 2, kind: output, shape index: {}]
  %s3 = sld [smem:[#allocation0]]
  $region26: #{tpu_custom_call.1} parent=0
    _
  %s5 = ssub.s32 1, %s3
  %s6 = scalar_select 0, %s5, %s3
  $region1: #{tpu_custom_call.1} parent=0
    #allocation2 [shape = 'u8[20480]{0}', space=vmem, size = 0x5000, scoped, tag = 'input window, operand 0, single buffered']
    #allocation3 [shape = 's32[1]{0}', space=sflag, size = 0x4, scoped, tag = 'scoped memory for tpu_custom_call.1']
    #allocation4 [shape = 's32[1]{0}', space=sflag, size = 0x4, scoped, tag = 'scoped memory for tpu_custom_call.1']
    #allocation5 [shape = 'u8[8192]{0}', space=vmem, size = 0x2000, scoped, tag = 'input window, operand 1, single buffered']
    #allocation6 [shape = 's32[1]{0}', space=sflag, size = 0x4, scoped, tag = 'scoped memory for tpu_custom_call.1']
    #allocation7 [shape = 'u8[4096]{0}', space=vmem, size = 0x1000, scoped, tag = 'output window, operand 0, single buffered']
    %7 = vsyncpa [#allocation3], 0
    %8 = vsyncpa [#allocation6], 0
    %9 = vsyncpa [#allocation4], 0
    // Predicated region
    $region2: #{tpu_custom_call.1} parent=1 // pred_check
      _
    $region3: #{tpu_custom_call.1} parent=1 // pred_check_branch
      %11 = sbr.rel (0) target = $region5
    $region4: #{tpu_custom_call.1} parent=1 // pred_region
      %s13 = ssub.s32 640, 640
      %14 = vsyncadd [#allocation3], %s13
      %s15 = sshll.u32 [#allocation2], 4
      %s16 = int_to_ptr.vmem [resolvable:$true] %s15
      %21 = dma.hbm_to_vmem [thread:$0]  %s0, 640, %s16, [#allocation3], 128, 128, 8
    $region5: #{tpu_custom_call.1} parent=1 // pred_fallthru
      _
    // Predicated region
    $region6: #{tpu_custom_call.1} parent=1 // pred_check
      _
    $region7: #{tpu_custom_call.1} parent=1 // pred_check_branch
      %23 = sbr.rel (0) target = $region9
    $region8: #{tpu_custom_call.1} parent=1 // pred_region
      %s25 = ssub.s32 256, 256
      %26 = vsyncadd [#allocation6], %s25
      %s27 = sshll.u32 [#allocation5], 4
      %s28 = int_to_ptr.vmem [resolvable:$true] %s27
      %33 = dma.hbm_to_vmem [thread:$0]  %s1, 256, %s28, [#allocation6], 128, 128, 8
    $region9: #{tpu_custom_call.1} parent=1 // pred_fallthru
      _
    // Predicated region
    $region10: #{tpu_custom_call.1} parent=1 // pred_check
      _
    $region11: #{tpu_custom_call.1} parent=1 // pred_check_branch
      %35 = sbr.rel (0) target = $region13
    $region12: #{tpu_custom_call.1} parent=1 // pred_region
      %36 = dma.done [#allocation3], 640
    $region13: #{tpu_custom_call.1} parent=1 // pred_fallthru
      _
    // Predicated region
    $region14: #{tpu_custom_call.1} parent=1 // pred_check
      _
    $region15: #{tpu_custom_call.1} parent=1 // pred_check_branch
      %38 = sbr.rel (0) target = $region17
    $region16: #{tpu_custom_call.1} parent=1 // pred_region
      %39 = dma.done [#allocation6], 256
    $region17: #{tpu_custom_call.1} parent=1 // pred_fallthru
      _
    %v40 = vld [vmem:[#allocation5] sm:$0xff]
    %v41 = vld [vmem:[#allocation5 + $0x8] sm:$0xff]
    %v42 = vld [vmem:[#allocation2] sm:$0xff]
    %s43 = scalar_lea.vmem [#allocation2], 8
    %v44 = vld [vmem:[%s43] sm:$0xff]
    %v45 = vsub.f32 %v44, %v42
    %vm46 = vcmask 130048
    %v48 = vsel %vm46, %v45, 0
    %50 = vmatprep.subr.mxu0 0.0
    %51 = vmatpush1.msra.mxu0 %v40
    %52 = vmatprep.subr.mxu0 0.0
    %53 = vmatpush1.msra.mxu0 %v41
    %54 = vmatprep.subr.mxu0 0.0
    %55 = vmatpush1.msra.mxu0 0.0
    %56 = vmatprep.subr.mxu0 0.0
    %57 = vmatpush1.msra.mxu0 0.0
    %58 = vmatprep.subr.mxu0 0.0
    %59 = vmatpush1.msra.mxu0 0.0
    %60 = vmatprep.subr.mxu0 0.0
    %61 = vmatpush1.msra.mxu0 0.0
    %62 = vmatprep.subr.mxu0 0.0
    %63 = vmatpush1.msra.mxu0 0.0
    %64 = vmatprep.subr.mxu0 0.0
    %65 = vmatpush1.msra.mxu0 0.0
    %66 = vmatprep.subr.mxu0 0.0
    %67 = vmatpush1.msra.mxu0 0.0
    %68 = vmatprep.subr.mxu0 0.0
    %69 = vmatpush1.msra.mxu0 0.0
    %70 = vmatprep.subr.mxu0 0.0
    %71 = vmatpush1.msra.mxu0 0.0
    %72 = vmatprep.subr.mxu0 0.0
    %73 = vmatpush1.msra.mxu0 0.0
    %74 = vmatprep.subr.mxu0 0.0
    %75 = vmatpush1.msra.mxu0 0.0
    %76 = vmatprep.subr.mxu0 0.0
    %77 = vmatpush1.msra.mxu0 0.0
    %78 = vmatprep.subr.mxu0 0.0
    %79 = vmatpush1.msra.mxu0 0.0
    %80 = vmatprep.subr.mxu0 0.0
    %81 = vmatpush1.msra.mxu0 0.0
    %82 = vmatprep.subr.mxu0 0.0
    %83 = vmatpush1.msra.mxu0 0.0
    %84 = vmatprep.subr.mxu0 0.0
    %85 = vmatpush1.msra.mxu0 0.0
    %86 = vmatprep.subr.mxu0 0.0
    %87 = vmatpush1.msra.mxu0 0.0
    %88 = vmatprep.subr.mxu0 0.0
    %89 = vmatpush1.msra.mxu0 0.0
    %90 = vmatprep.subr.mxu0 0.0
    %91 = vmatpush1.msra.mxu0 0.0
    %92 = vmatprep.subr.mxu0 0.0
    %93 = vmatpush1.msra.mxu0 0.0
    %94 = vmatprep.subr.mxu0 0.0
    %95 = vmatpush1.msra.mxu0 0.0
    %96 = vmatprep.subr.mxu0 0.0
    %97 = vmatpush1.msra.mxu0 0.0
    %98 = vmatprep.subr.mxu0 0.0
    %99 = vmatpush1.msra.mxu0 0.0
    %100 = vmatprep.subr.mxu0 0.0
    %101 = vmatpush1.msra.mxu0 0.0
    %102 = vmatprep.subr.mxu0 0.0
    %103 = vmatpush1.msra.mxu0 0.0
    %104 = vmatprep.subr.mxu0 0.0
    %105 = vmatpush1.msra.mxu0 0.0
    %106 = vmatprep.subr.mxu0 0.0
    %107 = vmatpush1.msra.mxu0 0.0
    %108 = vmatprep.subr.mxu0 0.0
    %109 = vmatpush1.msra.mxu0 0.0
    %110 = vmatprep.subr.mxu0 0.0
    %111 = vmatpush1.msra.mxu0 0.0
    %112 = vmatprep.subr.mxu0 0.0
    %113 = vmatpush1.msra.mxu0 0.0
    %114 = vmatprep.mubr.f32.mxu0 0.0
    %115 = vmatmul.mubr.f32.gmra.mrb[0].mxu0 %v48
    %v116 = vpop.f32.mrb[0].mxu0
    %v117 = vadd.f32 0.0, %v116
    %v118 = vpop.f32.mrb[0].mxu0
    %119 = vdwg.mxu0
    %vm120 = vcmask 261120
    %121 = vst.msk [vmem:[#allocation7] sm:$0xff] %vm120, %v117
    %s122 = scalar_lea.vmem [#allocation2], 16
    %v123 = vld [vmem:[%s122] sm:$0xff]
    %v124 = vsub.f32 %v123, %v42
    %v126 = vsel %vm46, %v124, 0
    %128 = vmatprep.subr.mxu0 0.0
    %129 = vmatpush1.msra.mxu0 %v40
    %130 = vmatprep.subr.mxu0 0.0
    %131 = vmatpush1.msra.mxu0 %v41
    %132 = vmatprep.subr.mxu0 0.0
    %133 = vmatpush1.msra.mxu0 0.0
    %134 = vmatprep.subr.mxu0 0.0
    %135 = vmatpush1.msra.mxu0 0.0
    %136 = vmatprep.subr.mxu0 0.0
    %137 = vmatpush1.msra.mxu0 0.0
    %138 = vmatprep.subr.mxu0 0.0
    %139 = vmatpush1.msra.mxu0 0.0
    %140 = vmatprep.subr.mxu0 0.0
    %141 = vmatpush1.msra.mxu0 0.0
    %142 = vmatprep.subr.mxu0 0.0
    %143 = vmatpush1.msra.mxu0 0.0
    %144 = vmatprep.subr.mxu0 0.0
    %145 = vmatpush1.msra.mxu0 0.0
    %146 = vmatprep.subr.mxu0 0.0
    %147 = vmatpush1.msra.mxu0 0.0
    %148 = vmatprep.subr.mxu0 0.0
    %149 = vmatpush1.msra.mxu0 0.0
    %150 = vmatprep.subr.mxu0 0.0
    %151 = vmatpush1.msra.mxu0 0.0
    %152 = vmatprep.subr.mxu0 0.0
    %153 = vmatpush1.msra.mxu0 0.0
    %154 = vmatprep.subr.mxu0 0.0
    %155 = vmatpush1.msra.mxu0 0.0
    %156 = vmatprep.subr.mxu0 0.0
    %157 = vmatpush1.msra.mxu0 0.0
    %158 = vmatprep.subr.mxu0 0.0
    %159 = vmatpush1.msra.mxu0 0.0
    %160 = vmatprep.subr.mxu0 0.0
    %161 = vmatpush1.msra.mxu0 0.0
    %162 = vmatprep.subr.mxu0 0.0
    %163 = vmatpush1.msra.mxu0 0.0
    %164 = vmatprep.subr.mxu0 0.0
    %165 = vmatpush1.msra.mxu0 0.0
    %166 = vmatprep.subr.mxu0 0.0
    %167 = vmatpush1.msra.mxu0 0.0
    %168 = vmatprep.subr.mxu0 0.0
    %169 = vmatpush1.msra.mxu0 0.0
    %170 = vmatprep.subr.mxu0 0.0
    %171 = vmatpush1.msra.mxu0 0.0
    %172 = vmatprep.subr.mxu0 0.0
    %173 = vmatpush1.msra.mxu0 0.0
    %174 = vmatprep.subr.mxu0 0.0
    %175 = vmatpush1.msra.mxu0 0.0
    %176 = vmatprep.subr.mxu0 0.0
    %177 = vmatpush1.msra.mxu0 0.0
    %178 = vmatprep.subr.mxu0 0.0
    %179 = vmatpush1.msra.mxu0 0.0
    %180 = vmatprep.subr.mxu0 0.0
    %181 = vmatpush1.msra.mxu0 0.0
    %182 = vmatprep.subr.mxu0 0.0
    %183 = vmatpush1.msra.mxu0 0.0
    %184 = vmatprep.subr.mxu0 0.0
    %185 = vmatpush1.msra.mxu0 0.0
    %186 = vmatprep.subr.mxu0 0.0
    %187 = vmatpush1.msra.mxu0 0.0
    %188 = vmatprep.subr.mxu0 0.0
    %189 = vmatpush1.msra.mxu0 0.0
    %190 = vmatprep.subr.mxu0 0.0
    %191 = vmatpush1.msra.mxu0 0.0
    %192 = vmatprep.mubr.f32.mxu0 0.0
    %193 = vmatmul.mubr.f32.gmra.mrb[0].mxu0 %v126
    %v194 = vpop.f32.mrb[0].mxu0
    %v195 = vadd.f32 0.0, %v194
    %v196 = vpop.f32.mrb[0].mxu0
    %197 = vdwg.mxu0
    %199 = vrot.lane.b32.xlu0 %v195, 32
    %v200 = vpop.permute.xlu0 %199
    %vm202 = vcmask 523520
    %203 = vst.msk [vmem:[#allocation7] sm:$0xff] %vm202, %v200
    %s204 = scalar_lea.vmem [#allocation2], 24
    %v205 = vld [vmem:[%s204] sm:$0xff]
    %v206 = vsub.f32 %v205, %v42
    %v208 = vsel %vm46, %v206, 0
    %210 = vmatprep.subr.mxu0 0.0
    %211 = vmatpush1.msra.mxu0 %v40
    %212 = vmatprep.subr.mxu0 0.0
    %213 = vmatpush1.msra.mxu0 %v41
    %214 = vmatprep.subr.mxu0 0.0
    %215 = vmatpush1.msra.mxu0 0.0
    %216 = vmatprep.subr.mxu0 0.0
    %217 = vmatpush1.msra.mxu0 0.0
    %218 = vmatprep.subr.mxu0 0.0
    %219 = vmatpush1.msra.mxu0 0.0
    %220 = vmatprep.subr.mxu0 0.0
    %221 = vmatpush1.msra.mxu0 0.0
    %222 = vmatprep.subr.mxu0 0.0
    %223 = vmatpush1.msra.mxu0 0.0
    %224 = vmatprep.subr.mxu0 0.0
    %225 = vmatpush1.msra.mxu0 0.0
    %226 = vmatprep.subr.mxu0 0.0
    %227 = vmatpush1.msra.mxu0 0.0
    %228 = vmatprep.subr.mxu0 0.0
    %229 = vmatpush1.msra.mxu0 0.0
    %230 = vmatprep.subr.mxu0 0.0
    %231 = vmatpush1.msra.mxu0 0.0
    %232 = vmatprep.subr.mxu0 0.0
    %233 = vmatpush1.msra.mxu0 0.0
    %234 = vmatprep.subr.mxu0 0.0
    %235 = vmatpush1.msra.mxu0 0.0
    %236 = vmatprep.subr.mxu0 0.0
    %237 = vmatpush1.msra.mxu0 0.0
    %238 = vmatprep.subr.mxu0 0.0
    %239 = vmatpush1.msra.mxu0 0.0
    %240 = vmatprep.subr.mxu0 0.0
    %241 = vmatpush1.msra.mxu0 0.0
    %242 = vmatprep.subr.mxu0 0.0
    %243 = vmatpush1.msra.mxu0 0.0
    %244 = vmatprep.subr.mxu0 0.0
    %245 = vmatpush1.msra.mxu0 0.0
    %246 = vmatprep.subr.mxu0 0.0
    %247 = vmatpush1.msra.mxu0 0.0
    %248 = vmatprep.subr.mxu0 0.0
    %249 = vmatpush1.msra.mxu0 0.0
    %250 = vmatprep.subr.mxu0 0.0
    %251 = vmatpush1.msra.mxu0 0.0
    %252 = vmatprep.subr.mxu0 0.0
    %253 = vmatpush1.msra.mxu0 0.0
    %254 = vmatprep.subr.mxu0 0.0
    %255 = vmatpush1.msra.mxu0 0.0
    %256 = vmatprep.subr.mxu0 0.0
    %257 = vmatpush1.msra.mxu0 0.0
    %258 = vmatprep.subr.mxu0 0.0
    %259 = vmatpush1.msra.mxu0 0.0
    %260 = vmatprep.subr.mxu0 0.0
    %261 = vmatpush1.msra.mxu0 0.0
    %262 = vmatprep.subr.mxu0 0.0
    %263 = vmatpush1.msra.mxu0 0.0
    %264 = vmatprep.subr.mxu0 0.0
    %265 = vmatpush1.msra.mxu0 0.0
    %266 = vmatprep.subr.mxu0 0.0
    %267 = vmatpush1.msra.mxu0 0.0
    %268 = vmatprep.subr.mxu0 0.0
    %269 = vmatpush1.msra.mxu0 0.0
    %270 = vmatprep.subr.mxu0 0.0
    %271 = vmatpush1.msra.mxu0 0.0
    %272 = vmatprep.subr.mxu0 0.0
    %273 = vmatpush1.msra.mxu0 0.0
    %274 = vmatprep.mubr.f32.mxu0 0.0
    %275 = vmatmul.mubr.f32.gmra.mrb[0].mxu0 %v208
    %v276 = vpop.f32.mrb[0].mxu0
    %v277 = vadd.f32 0.0, %v276
    %v278 = vpop.f32.mrb[0].mxu0
    %279 = vdwg.mxu0
    %281 = vrot.lane.b32.xlu0 %v277, 64
    %v282 = vpop.permute.xlu0 %281
    %vm284 = vcmask 785920
    %285 = vst.msk [vmem:[#allocation7] sm:$0xff] %vm284, %v282
    %s286 = scalar_lea.vmem [#allocation2], 32
    %v287 = vld [vmem:[%s286] sm:$0xff]
    %v288 = vsub.f32 %v287, %v42
    %v290 = vsel %vm46, %v288, 0
    %292 = vmatprep.subr.mxu0 0.0
    %293 = vmatpush1.msra.mxu0 %v40
    %294 = vmatprep.subr.mxu0 0.0
    %295 = vmatpush1.msra.mxu0 %v41
    %296 = vmatprep.subr.mxu0 0.0
    %297 = vmatpush1.msra.mxu0 0.0
    %298 = vmatprep.subr.mxu0 0.0
    %299 = vmatpush1.msra.mxu0 0.0
    %300 = vmatprep.subr.mxu0 0.0
    %301 = vmatpush1.msra.mxu0 0.0
    %302 = vmatprep.subr.mxu0 0.0
    %303 = vmatpush1.msra.mxu0 0.0
    %304 = vmatprep.subr.mxu0 0.0
    %305 = vmatpush1.msra.mxu0 0.0
    %306 = vmatprep.subr.mxu0 0.0
    %307 = vmatpush1.msra.mxu0 0.0
    %308 = vmatprep.subr.mxu0 0.0
    %309 = vmatpush1.msra.mxu0 0.0
    %310 = vmatprep.subr.mxu0 0.0
    %311 = vmatpush1.msra.mxu0 0.0
    %312 = vmatprep.subr.mxu0 0.0
    %313 = vmatpush1.msra.mxu0 0.0
    %314 = vmatprep.subr.mxu0 0.0
    %315 = vmatpush1.msra.mxu0 0.0
    %316 = vmatprep.subr.mxu0 0.0
    %317 = vmatpush1.msra.mxu0 0.0
    %318 = vmatprep.subr.mxu0 0.0
    %319 = vmatpush1.msra.mxu0 0.0
    %320 = vmatprep.subr.mxu0 0.0
    %321 = vmatpush1.msra.mxu0 0.0
    %322 = vmatprep.subr.mxu0 0.0
    %323 = vmatpush1.msra.mxu0 0.0
    %324 = vmatprep.subr.mxu0 0.0
    %325 = vmatpush1.msra.mxu0 0.0
    %326 = vmatprep.subr.mxu0 0.0
    %327 = vmatpush1.msra.mxu0 0.0
    %328 = vmatprep.subr.mxu0 0.0
    %329 = vmatpush1.msra.mxu0 0.0
    %330 = vmatprep.subr.mxu0 0.0
    %331 = vmatpush1.msra.mxu0 0.0
    %332 = vmatprep.subr.mxu0 0.0
    %333 = vmatpush1.msra.mxu0 0.0
    %334 = vmatprep.subr.mxu0 0.0
    %335 = vmatpush1.msra.mxu0 0.0
    %336 = vmatprep.subr.mxu0 0.0
    %337 = vmatpush1.msra.mxu0 0.0
    %338 = vmatprep.subr.mxu0 0.0
    %339 = vmatpush1.msra.mxu0 0.0
    %340 = vmatprep.subr.mxu0 0.0
    %341 = vmatpush1.msra.mxu0 0.0
    %342 = vmatprep.subr.mxu0 0.0
    %343 = vmatpush1.msra.mxu0 0.0
    %344 = vmatprep.subr.mxu0 0.0
    %345 = vmatpush1.msra.mxu0 0.0
    %346 = vmatprep.subr.mxu0 0.0
    %347 = vmatpush1.msra.mxu0 0.0
    %348 = vmatprep.subr.mxu0 0.0
    %349 = vmatpush1.msra.mxu0 0.0
    %350 = vmatprep.subr.mxu0 0.0
    %351 = vmatpush1.msra.mxu0 0.0
    %352 = vmatprep.subr.mxu0 0.0
    %353 = vmatpush1.msra.mxu0 0.0
    %354 = vmatprep.subr.mxu0 0.0
    %355 = vmatpush1.msra.mxu0 0.0
    %356 = vmatprep.mubr.f32.mxu0 0.0
    %357 = vmatmul.mubr.f32.gmra.mrb[0].mxu0 %v290
    %v358 = vpop.f32.mrb[0].mxu0
    %v359 = vadd.f32 0.0, %v358
    %v360 = vpop.f32.mrb[0].mxu0
    %361 = vdwg.mxu0
    %363 = vrot.lane.b32.xlu0 %v359, 96
    %v364 = vpop.permute.xlu0 %363
    %vm366 = vcmask 1048320
    %367 = vst.msk [vmem:[#allocation7] sm:$0xff] %vm366, %v364
    // Predicated region
    $region18: #{tpu_custom_call.1} parent=1 // pred_check
      _
    $region19: #{tpu_custom_call.1} parent=1 // pred_check_branch
      %369 = sbr.rel (0) target = $region21
    $region20: #{tpu_custom_call.1} parent=1 // pred_region
      %s371 = ssub.s32 128, 128
      %372 = vsyncadd [#allocation4], %s371
      %s374 = sshll.u32 [#allocation7], 4
      %s375 = int_to_ptr.vmem [resolvable:$true] %s374
      %377 = dma.vmem_to_hbm [thread:$0]  %s375, 128, %s2, [#allocation4]
    $region21: #{tpu_custom_call.1} parent=1 // pred_fallthru
      _
    // Predicated region
    $region22: #{tpu_custom_call.1} parent=1 // pred_check
      _
    $region23: #{tpu_custom_call.1} parent=1 // pred_check_branch
      %379 = sbr.rel (0) target = $region25
    $region24: #{tpu_custom_call.1} parent=1 // pred_region
      %380 = dma.done [#allocation4], 128
    $region25: #{tpu_custom_call.1} parent=1 // pred_fallthru
      _
    %381 = vsyncpa [#allocation3], 1
    %382 = vsyncpa [#allocation6], 1
    %383 = vsyncpa [#allocation4], 1

</llo_original>
